<compile_context>
chip_gen: v6e
topology: v6e:2x2x1
jax: 0.10.0
libtpu: 0.0.40
codegen_flags: <defaults>
</compile_context>

<pallas_src>
import functools

import jax
import jax.numpy as jnp
from jax.experimental import pallas as pl
from jax.experimental.pallas import tpu as pltpu


_VMEM_SPEC = pl.BlockSpec(memory_space=pltpu.MemorySpace.VMEM)
_VMEM_LIMIT = 32 * 1024 * 1024          # safe on v5e/v6e (128 MiB) and v7x (64 MiB)
_TILE_BUDGET = 2 * 1024 * 1024          # ~2 MiB per input tile (double-buffered)


# -----------------------------------------------------------------------------
# Tile selection helpers
# -----------------------------------------------------------------------------
def _largest_divisor_le(n, cap):
    cap = int(max(1, min(cap, n)))
    for d in range(cap, 0, -1):
        if n % d == 0:
            return d
    return 1


def _choose_tiles_3d(n, c, l, tile_budget_bytes=_TILE_BUDGET):
    # Lane tile: a multiple of 128 that divides L keeps stores unmasked and the
    # grid exact; otherwise fall back to the full (untiled) L.
    tl = l
    for cand in (512, 384, 256, 128):
        if l >= cand and l % cand == 0:
            tl = cand
            break
    max_tn = max(1, tile_budget_bytes // (c * tl * 4))
    tn = _largest_divisor_le(n, max_tn)
    return tn, tl


def _choose_tn_2d(n, c, tile_budget_bytes=_TILE_BUDGET):
    max_tn = max(1, tile_budget_bytes // (c * 4))
    if n <= max_tn:
        return n
    # Prefer a sublane-aligned (multiple of 8) divisor of N so blocks satisfy
    # the (8, 128) tiling rule and the grid is exact.
    best = None
    t = 8
    while t <= max_tn:
        if n % t == 0:
            best = t
        t += 8
    return best if best is not None else n


# -----------------------------------------------------------------------------
# Kernels
# -----------------------------------------------------------------------------
def _stats3d_kernel(x_ref, sum_ref, sumsq_ref):
    """Accumulate per-channel sum / sumsq over (N, L).  x_ref: (tn, C, tl)."""
    i = pl.program_id(0)
    j = pl.program_id(1)

    @pl.when((i == 0) & (j == 0))
    def _():
        sum_ref[...] = jnp.zeros_like(sum_ref)
        sumsq_ref[...] = jnp.zeros_like(sumsq_ref)

    x = x_ref[...].astype(jnp.float32)              # (tn, C, tl)
    # Batch-axis reduce first (VPU adds across vreg slices) ...
    xb = jnp.sum(x, axis=0)                         # (C, tl)
    xb2 = jnp.sum(x * x, axis=0)                    # (C, tl)
    # ... then a single cross-lane (XLU) reduce per tile.
    sum_ref[...] += jnp.sum(xb, axis=1, keepdims=True)     # (C, 1)
    sumsq_ref[...] += jnp.sum(xb2, axis=1, keepdims=True)  # (C, 1)


def _norm3d_kernel(x_ref, scale_ref, shift_ref, y_ref):
    """y = x * scale + shift with per-channel scale/shift.  x_ref: (tn, C, tl)."""
    x = x_ref[...].astype(jnp.float32)
    scale = scale_ref[...][None]                    # (1, C, 1)
    shift = shift_ref[...][None]                    # (1, C, 1)
    y_ref[...] = (x * scale + shift).astype(y_ref.dtype)


def _stats2d_kernel(x_ref, sum_ref, sumsq_ref):
    """Accumulate per-channel sum / sumsq over N.  x_ref: (tn, C), C on lanes."""
    @pl.when(pl.program_id(0) == 0)
    def _():
        sum_ref[...] = jnp.zeros_like(sum_ref)
        sumsq_ref[...] = jnp.zeros_like(sumsq_ref)

    x = x_ref[...].astype(jnp.float32)              # (tn, C)
    sum_ref[...] += jnp.sum(x, axis=0, keepdims=True)      # (1, C) lane-dense
    sumsq_ref[...] += jnp.sum(x * x, axis=0, keepdims=True)


def _norm2d_kernel(x_ref, scale_ref, shift_ref, y_ref):
    x = x_ref[...].astype(jnp.float32)              # (tn, C)
    y_ref[...] = (x * scale_ref[...] + shift_ref[...]).astype(y_ref.dtype)


def _finalize_train_kernel(sum_ref, sumsq_ref, gamma_ref, beta_ref,
                           mu_ref, sigma_ref,
                           scale_ref, shift_ref, new_mu_ref, new_sigma_ref,
                           *, count, epsilon, momentum):
    """Per-channel: fold stats + affine into (scale, shift); update running stats."""
    s = sum_ref[...]
    ss = sumsq_ref[...]
    mean = s / count
    # Unbiased variance (ddof=1), matching torch.std.  count == 1 -> 0/0 = NaN,
    # same as torch (semantics preserved on purpose).
    var = (ss - s * mean) / (count - 1.0)
    std = jnp.sqrt(jnp.maximum(var, 0.0))
    # NOTE: epsilon added to std (NOT variance) -- matches the PyTorch AdaBN module.
    inv = 1.0 / (std + epsilon)                     # C divides only -> negligible
    gamma = gamma_ref[...]
    scale = gamma * inv
    scale_ref[...] = scale
    shift_ref[...] = beta_ref[...] - mean * scale
    new_mu_ref[...] = momentum * mean + (1.0 - momentum) * mu_ref[...]
    new_sigma_ref[...] = momentum * std + (1.0 - momentum) * sigma_ref[...]


def _finalize_eval_kernel(gamma_ref, beta_ref, mu_ref, sigma_ref,
                          scale_ref, shift_ref, *, epsilon):
    scale = gamma_ref[...] / (sigma_ref[...] + epsilon)
    scale_ref[...] = scale
    shift_ref[...] = beta_ref[...] - mu_ref[...] * scale


# -----------------------------------------------------------------------------
# Pallas wrappers
# -----------------------------------------------------------------------------
def adabn_stats_3d(x):
    n, c, l = x.shape
    tn, tl = _choose_tiles_3d(n, c, l)
    grid = (n // tn, l // tl)
    stat_shape = jax.ShapeDtypeStruct((c, 1), jnp.float32)
    return pl.pallas_call(
        _stats3d_kernel,
        out_shape=(stat_shape, stat_shape),
        grid_spec=pltpu.PrefetchScalarGridSpec(
            num_scalar_prefetch=0,
            grid=grid,
            in_specs=[pl.BlockSpec((tn, c, tl), lambda i, j: (i, 0, j))],
            out_specs=(pl.BlockSpec((c, 1), lambda i, j: (0, 0)),
                       pl.BlockSpec((c, 1), lambda i, j: (0, 0))),
        ),
        compiler_params=pltpu.CompilerParams(
            dimension_semantics=("arbitrary", "arbitrary"),
            vmem_limit_bytes=_VMEM_LIMIT),
        cost_estimate=pl.CostEstimate(
            flops=3 * n * c * l, transcendentals=0,
            bytes_accessed=int(x.size) * x.dtype.itemsize),
    )(x)


def adabn_normalize_3d(x, scale, shift):
    n, c, l = x.shape
    tn, tl = _choose_tiles_3d(n, c, l)
    grid = (n // tn, l // tl)
    return pl.pallas_call(
        _norm3d_kernel,
        out_shape=jax.ShapeDtypeStruct((n, c, l), x.dtype),
        grid_spec=pltpu.PrefetchScalarGridSpec(
            num_scalar_prefetch=0,
            grid=grid,
            in_specs=[pl.BlockSpec((tn, c, tl), lambda i, j: (i, 0, j)),
                      pl.BlockSpec((c, 1), lambda i, j: (0, 0)),
                      pl.BlockSpec((c, 1), lambda i, j: (0, 0))],
            out_specs=pl.BlockSpec((tn, c, tl), lambda i, j: (i, 0, j)),
        ),
        compiler_params=pltpu.CompilerParams(
            dimension_semantics=("parallel", "parallel"),
            vmem_limit_bytes=_VMEM_LIMIT),
        cost_estimate=pl.CostEstimate(
            flops=2 * n * c * l, transcendentals=0,
            bytes_accessed=2 * int(x.size) * x.dtype.itemsize),
    )(x, scale, shift)


def adabn_stats_2d(x):
    n, c = x.shape
    tn = _choose_tn_2d(n, c)
    grid = (n // tn,)
    stat_shape = jax.ShapeDtypeStruct((1, c), jnp.float32)
    return pl.pallas_call(
        _stats2d_kernel,
        out_shape=(stat_shape, stat_shape),
        grid_spec=pltpu.PrefetchScalarGridSpec(
            num_scalar_prefetch=0,
            grid=grid,
            in_specs=[pl.BlockSpec((tn, c), lambda i: (i, 0))],
            out_specs=(pl.BlockSpec((1, c), lambda i: (0, 0)),
                       pl.BlockSpec((1, c), lambda i: (0, 0))),
        ),
        compiler_params=pltpu.CompilerParams(
            dimension_semantics=("arbitrary",),
            vmem_limit_bytes=_VMEM_LIMIT),
        cost_estimate=pl.CostEstimate(
            flops=3 * n * c, transcendentals=0,
            bytes_accessed=int(x.size) * x.dtype.itemsize),
    )(x)


def adabn_normalize_2d(x, scale, shift):
    n, c = x.shape
    tn = _choose_tn_2d(n, c)
    grid = (n // tn,)
    return pl.pallas_call(
        _norm2d_kernel,
        out_shape=jax.ShapeDtypeStruct((n, c), x.dtype),
        grid_spec=pltpu.PrefetchScalarGridSpec(
            num_scalar_prefetch=0,
            grid=grid,
            in_specs=[pl.BlockSpec((tn, c), lambda i: (i, 0)),
                      pl.BlockSpec((1, c), lambda i: (0, 0)),
                      pl.BlockSpec((1, c), lambda i: (0, 0))],
            out_specs=pl.BlockSpec((tn, c), lambda i: (i, 0)),
        ),
        compiler_params=pltpu.CompilerParams(
            dimension_semantics=("parallel",),
            vmem_limit_bytes=_VMEM_LIMIT),
        cost_estimate=pl.CostEstimate(
            flops=2 * n * c, transcendentals=0,
            bytes_accessed=2 * int(x.size) * x.dtype.itemsize),
    )(x, scale, shift)


def adabn_finalize_train(sum_, sumsq, gamma, beta, mu_c, sigma_c,
                         *, count, epsilon, momentum):
    kern = functools.partial(_finalize_train_kernel, count=float(count),
                             epsilon=float(epsilon), momentum=float(momentum))
    shp = jax.ShapeDtypeStruct(gamma.shape, jnp.float32)
    return pl.pallas_call(
        kern,
        out_shape=(shp, shp, shp, shp),
        in_specs=[_VMEM_SPEC] * 6,
        out_specs=(_VMEM_SPEC,) * 4,
    )(sum_, sumsq, gamma, beta, mu_c, sigma_c)


def adabn_finalize_eval(gamma, beta, mu_c, sigma_c, *, epsilon):
    kern = functools.partial(_finalize_eval_kernel, epsilon=float(epsilon))
    shp = jax.ShapeDtypeStruct(gamma.shape, jnp.float32)
    return pl.pallas_call(
        kern,
        out_shape=(shp, shp),
        in_specs=[_VMEM_SPEC] * 4,
        out_specs=(_VMEM_SPEC,) * 2,
    )(gamma, beta, mu_c, sigma_c)


# -----------------------------------------------------------------------------
# Module-level glue (parameter / buffer handling, 2-D vs 3-D inputs)
# -----------------------------------------------------------------------------
class AdaBN1d:
    def __init__(self, num_features, num_classes=1000, epsilon=1e-5, momentum=0.1):
        self.num_features = num_features
        self.num_classes = num_classes
        self.epsilon = float(epsilon)
        self.momentum = float(momentum)
        # Buffers (deterministic init, matching the PyTorch __init__ shapes).
        self.mu = jnp.zeros((num_classes, 1, num_features, 1), jnp.float32)
        self.sigma = jnp.ones((num_classes, 1, num_features, 1), jnp.float32)
        # Parameters.
        self.beta = jnp.zeros((1, num_features, 1), jnp.float32)
        self.gamma = jnp.ones((1, num_features, 1), jnp.float32)
        self.training = True
        self.it_count = 0
        self.batch_size = 0

    def __call__(self, x, class_id: int):
        assert x.ndim in (2, 3), "Input tensor must be 3d or 2d"
        assert class_id < self.num_classes
        # TODO(synk): it_count / batch_size bookkeeping is host-side state, not
        # part of the Pallas kernels (same as the PyTorch module attributes).
        self.it_count += 1

        if x.ndim == 3:
            n, c, l = x.shape
            gamma = self.gamma[0]                # (C, 1)
            beta = self.beta[0]                  # (C, 1)
            mu_c = self.mu[class_id, 0]          # (C, 1)
            sigma_c = self.sigma[class_id, 0]    # (C, 1)
            if self.training:
                if self.batch_size == 0:
                    self.batch_size = n
                s, ss = adabn_stats_3d(x)
                scale, shift, new_mu, new_sigma = adabn_finalize_train(
                    s, ss, gamma, beta, mu_c, sigma_c,
                    count=n * l, epsilon=self.epsilon, momentum=self.momentum)
                self.mu = self.mu.at[class_id, 0].set(new_mu)
                self.sigma = self.sigma.at[class_id, 0].set(new_sigma)
            else:
                scale, shift = adabn_finalize_eval(
                    gamma, beta, mu_c, sigma_c, epsilon=self.epsilon)
            return adabn_normalize_3d(x, scale, shift)

        # ---- 2-D path: keep (N, C) with C on the 128-lane axis (lane-dense). ----
        n, c = x.shape
        gamma = self.gamma[0].reshape(1, c)
        beta = self.beta[0].reshape(1, c)
        mu_c = self.mu[class_id, 0].reshape(1, c)
        sigma_c = self.sigma[class_id, 0].reshape(1, c)
        if self.training:
            if self.batch_size == 0:
                self.batch_size = n
            s, ss = adabn_stats_2d(x)
            scale, shift, new_mu, new_sigma = adabn_finalize_train(
                s, ss, gamma, beta, mu_c, sigma_c,
                count=n, epsilon=self.epsilon, momentum=self.momentum)
            self.mu = self.mu.at[class_id, 0].set(new_mu.reshape(c, 1))
            self.sigma = self.sigma.at[class_id, 0].set(new_sigma.reshape(c, 1))
        else:
            scale, shift = adabn_finalize_eval(
                gamma, beta, mu_c, sigma_c, epsilon=self.epsilon)
        return adabn_normalize_2d(x, scale, shift)


# -----------------------------------------------------------------------------
# Self-check against a pure-JAX reference mirroring the PyTorch forward.
# -----------------------------------------------------------------------------
if __name__ == "__main__":
    key = jax.random.PRNGKey(0)
    N, C, L = 8, 32, 256
    N2 = 16
    num_classes = 10
    class_id = 3

    k1, k2 = jax.random.split(key)
    x3 = jax.random.normal(k1, (N, C, L), dtype=jnp.float32) * 2.0 + 0.5
    x2 = jax.random.normal(k2, (N2, C), dtype=jnp.float32) * 1.5 - 0.25

    m = AdaBN1d(num_features=C, num_classes=num_classes)
    eps, mom = m.epsilon, m.momentum

    # --- training-mode forward, 3-D (stats + finalize + normalize) ---
    m.training = True
    mu0 = m.mu[class_id, 0]          # zeros
    sg0 = m.sigma[class_id, 0]       # ones
    y3 = jax.block_until_ready(m(x3, class_id))
    mean3 = jnp.mean(x3, axis=(0, 2), keepdims=True)
    std3 = jnp.std(x3, axis=(0, 2), keepdims=True, ddof=1)
    ref3 = m.gamma * ((x3 - mean3) / (std3 + eps)) + m.beta
    assert jnp.allclose(y3, ref3, atol=2e-4, rtol=2e-4), "3-D train mismatch"
    ref_mu = mom * mean3[0] + (1.0 - mom) * mu0
    ref_sg = mom * std3[0] + (1.0 - mom) * sg0
    assert jnp.allclose(m.mu[class_id, 0], ref_mu, atol=2e-4, rtol=2e-4)
    assert jnp.allclose(m.sigma[class_id, 0], ref_sg, atol=2e-4, rtol=2e-4)

    # --- eval-mode forward, 3-D (uses the running stats just updated) ---
    m.training = False
    y3e = jax.block_until_ready(m(x3, class_id))
    ref3e = m.gamma * ((x3 - m.mu[class_id]) / (m.sigma[class_id] + eps)) + m.beta
    assert jnp.allclose(y3e, ref3e, atol=2e-4, rtol=2e-4), "3-D eval mismatch"

    # --- training-mode forward, 2-D (lane-dense (N, C) path) ---
    m.training = True
    mu0 = m.mu[class_id, 0].reshape(1, C)
    sg0 = m.sigma[class_id, 0].reshape(1, C)
    y2 = jax.block_until_ready(m(x2, class_id))
    mean2 = jnp.mean(x2, axis=0, keepdims=True)
    std2 = jnp.std(x2, axis=0, keepdims=True, ddof=1)
    ref2 = m.gamma[..., 0] * ((x2 - mean2) / (std2 + eps)) + m.beta[..., 0]
    assert jnp.allclose(y2, ref2, atol=2e-4, rtol=2e-4), "2-D train mismatch"
    ref_mu2 = mom * mean2 + (1.0 - mom) * mu0
    ref_sg2 = mom * std2 + (1.0 - mom) * sg0
    assert jnp.allclose(m.mu[class_id, 0].reshape(1, C), ref_mu2, atol=2e-4, rtol=2e-4)
    assert jnp.allclose(m.sigma[class_id, 0].reshape(1, C), ref_sg2, atol=2e-4, rtol=2e-4)

    # --- eval-mode forward, 2-D ---
    m.training = False
    y2e = jax.block_until_ready(m(x2, class_id))
    mu_c2 = m.mu[class_id, 0].reshape(1, C)
    sg_c2 = m.sigma[class_id, 0].reshape(1, C)
    ref2e = m.gamma[..., 0] * ((x2 - mu_c2) / (sg_c2 + eps)) + m.beta[..., 0]
    assert jnp.allclose(y2e, ref2e, atol=2e-4, rtol=2e-4), "2-D eval mismatch"

    print("KERNEL_OK")
</pallas_src>

<mosaic_0001>
module attributes {stable_mosaic.version = 11 : i64} {
  func.func @_stats3d_kernel(%arg0: i32, %arg1: i32, %arg2: memref<8x32x256xf32, #tpu.memory_space<vmem>>, %arg3: memref<32x1xf32, #tpu.memory_space<vmem>>, %arg4: memref<32x1xf32, #tpu.memory_space<vmem>>) attributes {dimension_semantics = [#tpu.dimension_semantics<arbitrary>, #tpu.dimension_semantics<arbitrary>], iteration_bounds = array<i64: 1, 1>, scalar_prefetch = 0 : i64, scratch_operands = 0 : i64, tpu.core_type = #tpu.core_type<tc>, window_params = [{transform_indices = @transform_0, window_bounds = array<i64: 8, 32, 256>}, {pipeline_mode = #tpu.pipeline_mode<synchronous>, transform_indices = @transform_1, window_bounds = array<i64: 32, 1>}, {pipeline_mode = #tpu.pipeline_mode<synchronous>, transform_indices = @transform_2, window_bounds = array<i64: 32, 1>}]} {
    %c0_i32 = arith.constant 0 : i32
    %0 = arith.cmpi eq, %arg0, %c0_i32 : i32
    %c0_i32_0 = arith.constant 0 : i32
    %1 = arith.cmpi eq, %arg1, %c0_i32_0 : i32
    %2 = arith.andi %0, %1 : i1
    %3 = arith.extui %2 : i1 to i32
    %c0_i32_1 = arith.constant 0 : i32
    %4 = arith.cmpi ne, %3, %c0_i32_1 : i32
    scf.if %4 {
      %cst_15 = arith.constant 0.000000e+00 : f32
      %19 = vector.broadcast %cst_15 : f32 to vector<32x1xf32>
      %c0_16 = arith.constant 0 : index
      %c0_17 = arith.constant 0 : index
      %20 = vector.load %arg3[%c0_16, %c0_17] : memref<32x1xf32, #tpu.memory_space<vmem>>, vector<32x1xf32>
      tpu.vector_store %arg3[%c0_16, %c0_17], %19 {strides = array<i32>} : memref<32x1xf32, #tpu.memory_space<vmem>>, vector<32x1xf32>,
      %cst_18 = arith.constant 0.000000e+00 : f32
      %21 = vector.broadcast %cst_18 : f32 to vector<32x1xf32>
      %c0_19 = arith.constant 0 : index
      %c0_20 = arith.constant 0 : index
      %22 = vector.load %arg4[%c0_19, %c0_20] : memref<32x1xf32, #tpu.memory_space<vmem>>, vector<32x1xf32>
      tpu.vector_store %arg4[%c0_19, %c0_20], %21 {strides = array<i32>} : memref<32x1xf32, #tpu.memory_space<vmem>>, vector<32x1xf32>,
    } else {
    }
    %c0 = arith.constant 0 : index
    %c0_2 = arith.constant 0 : index
    %c0_3 = arith.constant 0 : index
    %5 = vector.load %arg2[%c0, %c0_2, %c0_3] : memref<8x32x256xf32, #tpu.memory_space<vmem>>, vector<8x32x256xf32>
    %cst = arith.constant dense<0.000000e+00> : vector<32x256xf32>
    %6 = vector.multi_reduction <add>, %5, %cst [0] : vector<8x32x256xf32> to vector<32x256xf32>
    %7 = arith.mulf %5, %5 : vector<8x32x256xf32>
    %cst_4 = arith.constant dense<0.000000e+00> : vector<32x256xf32>
    %8 = vector.multi_reduction <add>, %7, %cst_4 [0] : vector<8x32x256xf32> to vector<32x256xf32>
    %c0_5 = arith.constant 0 : index
    %c0_6 = arith.constant 0 : index
    %9 = vector.load %arg3[%c0_5, %c0_6] : memref<32x1xf32, #tpu.memory_space<vmem>>, vector<32x1xf32>
    %cst_7 = arith.constant dense<0.000000e+00> : vector<32xf32>
    %10 = vector.multi_reduction <add>, %6, %cst_7 [1] : vector<32x256xf32> to vector<32xf32>
    %11 = vector.shape_cast %10 : vector<32xf32> to vector<32x1xf32>
    %12 = arith.addf %9, %11 : vector<32x1xf32>
    %c0_8 = arith.constant 0 : index
    %c0_9 = arith.constant 0 : index
    %13 = vector.load %arg3[%c0_8, %c0_9] : memref<32x1xf32, #tpu.memory_space<vmem>>, vector<32x1xf32>
    tpu.vector_store %arg3[%c0_8, %c0_9], %12 {strides = array<i32>} : memref<32x1xf32, #tpu.memory_space<vmem>>, vector<32x1xf32>,
    %c0_10 = arith.constant 0 : index
    %c0_11 = arith.constant 0 : index
    %14 = vector.load %arg4[%c0_10, %c0_11] : memref<32x1xf32, #tpu.memory_space<vmem>>, vector<32x1xf32>
    %cst_12 = arith.constant dense<0.000000e+00> : vector<32xf32>
    %15 = vector.multi_reduction <add>, %8, %cst_12 [1] : vector<32x256xf32> to vector<32xf32>
    %16 = vector.shape_cast %15 : vector<32xf32> to vector<32x1xf32>
    %17 = arith.addf %14, %16 : vector<32x1xf32>
    %c0_13 = arith.constant 0 : index
    %c0_14 = arith.constant 0 : index
    %18 = vector.load %arg4[%c0_13, %c0_14] : memref<32x1xf32, #tpu.memory_space<vmem>>, vector<32x1xf32>
    tpu.vector_store %arg4[%c0_13, %c0_14], %17 {strides = array<i32>} : memref<32x1xf32, #tpu.memory_space<vmem>>, vector<32x1xf32>,
    return
  }
  func.func @transform_0(%arg0: i32, %arg1: i32) -> (i32, i32, i32) {
    %c0_i32 = arith.constant 0 : i32
    %c0_i32_0 = arith.constant 0 : i32
    return %arg0, %c0_i32, %arg1 : i32, i32, i32
  }
  func.func @transform_1(%arg0: i32, %arg1: i32) -> (i32, i32) {
    %c0_i32 = arith.constant 0 : i32
    %c0_i32_0 = arith.constant 0 : i32
    %c0_i32_1 = arith.constant 0 : i32
    return %c0_i32, %c0_i32_0 : i32, i32
  }
  func.func @transform_2(%arg0: i32, %arg1: i32) -> (i32, i32) {
    %c0_i32 = arith.constant 0 : i32
    %c0_i32_0 = arith.constant 0 : i32
    %c0_i32_1 = arith.constant 0 : i32
    return %c0_i32, %c0_i32_0 : i32, i32
  }
}

</mosaic_0001>

<llo_original>
// kernel: tpu_custom_call.1
$region0: #{tpu_custom_call.1}
  #allocation0 [shape = 'u32[]', space=smem, size = 0x4, offset = 0x4, fixed_abs, tag = 'smem constant byte address 0x4 - core index']
  #allocation1 [shape = 'u32[144,128]{1,0:T(1,128)}', space=vmem, size = 0x12000, scoped, tag = 'internal scratch']
  %s0 = inlined_call_operand.hbm [shape: f32[8,32,256], index: 0, kind: input, shape index: {}]
  %s1 = inlined_call_operand.vmem [shape: f32[32,1], index: 1, kind: output, shape index: {0}]
  %s2 = inlined_call_operand.vmem [shape: f32[32,1], index: 2, kind: output, shape index: {1}]
  %3 = xla_tuple %s1, %s2
  %s4 = sld [smem:[#allocation0]]
  $region30: #{tpu_custom_call.1} parent=0
    _
  %s6 = ssub.s32 1, %s4
  %s7 = scalar_select 0, %s6, %s4
  $region1: #{tpu_custom_call.1} parent=0
    #allocation2 [shape = 'u8[262144]{0}', space=vmem, size = 0x40000, scoped, tag = 'input window, operand 0, single buffered']
    #allocation3 [shape = 's32[1]{0}', space=sflag, size = 0x4, scoped, tag = 'scoped memory for tpu_custom_call.1']
    %8 = vsyncpa [#allocation3], 0
    // Predicated region
    $region2: #{tpu_custom_call.1} parent=1 // pred_check
      _
    $region3: #{tpu_custom_call.1} parent=1 // pred_check_branch
      %10 = sbr.rel (0) target = $region5
    $region4: #{tpu_custom_call.1} parent=1 // pred_region
      %s12 = ssub.s32 8192, 8192
      %13 = vsyncadd [#allocation3], %s12
      %s14 = sshll.u32 [#allocation2], 4
      %s15 = int_to_ptr.vmem [resolvable:$true] %s14
      %20 = dma.hbm_to_vmem [thread:$0]  %s0, 8192, %s15, [#allocation3], 256, 256, 16
    $region5: #{tpu_custom_call.1} parent=1 // pred_fallthru
      _
    // Predicated region
    $region6: #{tpu_custom_call.1} parent=1 // pred_check
      _
    $region7: #{tpu_custom_call.1} parent=1 // pred_check_branch
      %22 = sbr.rel (0) target = $region9
    $region8: #{tpu_custom_call.1} parent=1 // pred_region
      %23 = dma.done [#allocation3], 8192
    $region9: #{tpu_custom_call.1} parent=1 // pred_fallthru
      _
    %p24 = scmp.eq.s32.totalorder 0, 0
    %p25 = scmp.eq.s32.totalorder 0, 0
    %p26 = pnand %p24, %p25
    %p27 = pneg %p26
    // Predicated region
    $region10: #{tpu_custom_call.1} parent=1 // pred_check
      _
    $region11: #{tpu_custom_call.1} parent=1 // pred_check_branch
      %29 = sbr.rel (%p26) target = $region13
    $region12: #{tpu_custom_call.1} parent=1 // pred_region
      %vm30 = vcmask 7168
      %31 = vst.msk [vmem:[%s1] sm:$0xff] %vm30, 0.0
      %32 = vst.msk [vmem:[%s1 + $0x8] sm:$0xff] %vm30, 0.0
      %33 = vst.msk [vmem:[%s1 + $0x10] sm:$0xff] %vm30, 0.0
      %34 = vst.msk [vmem:[%s1 + $0x18] sm:$0xff] %vm30, 0.0
      %35 = vst.msk [vmem:[%s2] sm:$0xff] %vm30, 0.0
      %36 = vst.msk [vmem:[%s2 + $0x8] sm:$0xff] %vm30, 0.0
      %37 = vst.msk [vmem:[%s2 + $0x10] sm:$0xff] %vm30, 0.0
      %38 = vst.msk [vmem:[%s2 + $0x18] sm:$0xff] %vm30, 0.0
    $region13: #{tpu_custom_call.1} parent=1 // pred_fallthru
      _
    %v39 = vld [vmem:[#allocation2] sm:$0xff]
    %v40 = vld [vmem:[#allocation2 + $0x8] sm:$0xff]
    %v41 = vld [vmem:[#allocation2 + $0x10] sm:$0xff]
    %v42 = vld [vmem:[#allocation2 + $0x18] sm:$0xff]
    %v43 = vld [vmem:[#allocation2 + $0x20] sm:$0xff]
    %v44 = vld [vmem:[#allocation2 + $0x28] sm:$0xff]
    %v45 = vld [vmem:[#allocation2 + $0x30] sm:$0xff]
    %v46 = vld [vmem:[#allocation2 + $0x38] sm:$0xff]
    %v47 = vld [vmem:[#allocation2 + $0x40] sm:$0xff]
    %v48 = vld [vmem:[#allocation2 + $0x48] sm:$0xff]
    %v49 = vld [vmem:[#allocation2 + $0x50] sm:$0xff]
    %v50 = vld [vmem:[#allocation2 + $0x58] sm:$0xff]
    %v51 = vld [vmem:[#allocation2 + $0x60] sm:$0xff]
    %v52 = vld [vmem:[#allocation2 + $0x68] sm:$0xff]
    %v53 = vld [vmem:[#allocation2 + $0x70] sm:$0xff]
    %v54 = vld [vmem:[#allocation2 + $0x78] sm:$0xff]
    %v55 = vld [vmem:[#allocation2 + $0x80] sm:$0xff]
    %v56 = vld [vmem:[#allocation2 + $0x88] sm:$0xff]
    %v57 = vld [vmem:[#allocation2 + $0x90] sm:$0xff]
    %v58 = vld [vmem:[#allocation2 + $0x98] sm:$0xff]
    %v59 = vld [vmem:[#allocation2 + $0xa0] sm:$0xff]
    %v60 = vld [vmem:[#allocation2 + $0xa8] sm:$0xff]
    %v61 = vld [vmem:[#allocation2 + $0xb0] sm:$0xff]
    %v62 = vld [vmem:[#allocation2 + $0xb8] sm:$0xff]
    %v63 = vld [vmem:[#allocation2 + $0xc0] sm:$0xff]
    %v64 = vld [vmem:[#allocation2 + $0xc8] sm:$0xff]
    %v65 = vld [vmem:[#allocation2 + $0xd0] sm:$0xff]
    %v66 = vld [vmem:[#allocation2 + $0xd8] sm:$0xff]
    %v67 = vld [vmem:[#allocation2 + $0xe0] sm:$0xff]
    %v68 = vld [vmem:[#allocation2 + $0xe8] sm:$0xff]
    %v69 = vld [vmem:[#allocation2 + $0xf0] sm:$0xff]
    %v70 = vld [vmem:[#allocation2 + $0xf8] sm:$0xff]
    %v71 = vld [vmem:[#allocation2 + $0x100] sm:$0xff]
    %v72 = vld [vmem:[#allocation2 + $0x108] sm:$0xff]
    %v73 = vld [vmem:[#allocation2 + $0x110] sm:$0xff]
    %v74 = vld [vmem:[#allocation2 + $0x118] sm:$0xff]
    %v75 = vld [vmem:[#allocation2 + $0x120] sm:$0xff]
    %v76 = vld [vmem:[#allocation2 + $0x128] sm:$0xff]
    %v77 = vld [vmem:[#allocation2 + $0x130] sm:$0xff]
    %v78 = vld [vmem:[#allocation2 + $0x138] sm:$0xff]
    %v79 = vld [vmem:[#allocation2 + $0x140] sm:$0xff]
    %v80 = vld [vmem:[#allocation2 + $0x148] sm:$0xff]
    %v81 = vld [vmem:[#allocation2 + $0x150] sm:$0xff]
    %v82 = vld [vmem:[#allocation2 + $0x158] sm:$0xff]
    %v83 = vld [vmem:[#allocation2 + $0x160] sm:$0xff]
    %v84 = vld [vmem:[#allocation2 + $0x168] sm:$0xff]
    %v85 = vld [vmem:[#allocation2 + $0x170] sm:$0xff]
    %v86 = vld [vmem:[#allocation2 + $0x178] sm:$0xff]
    %v87 = vld [vmem:[#allocation2 + $0x180] sm:$0xff]
    %v88 = vld [vmem:[#allocation2 + $0x188] sm:$0xff]
    %v89 = vld [vmem:[#allocation2 + $0x190] sm:$0xff]
    %v90 = vld [vmem:[#allocation2 + $0x198] sm:$0xff]
    %v91 = vld [vmem:[#allocation2 + $0x1a0] sm:$0xff]
    %v92 = vld [vmem:[#allocation2 + $0x1a8] sm:$0xff]
    %v93 = vld [vmem:[#allocation2 + $0x1b0] sm:$0xff]
    %v94 = vld [vmem:[#allocation2 + $0x1b8] sm:$0xff]
    %v95 = vld [vmem:[#allocation2 + $0x1c0] sm:$0xff]
    %v96 = vld [vmem:[#allocation2 + $0x1c8] sm:$0xff]
    %v97 = vld [vmem:[#allocation2 + $0x1d0] sm:$0xff]
    %v98 = vld [vmem:[#allocation2 + $0x1d8] sm:$0xff]
    %v99 = vld [vmem:[#allocation2 + $0x1e0] sm:$0xff]
    %v100 = vld [vmem:[#allocation2 + $0x1e8] sm:$0xff]
    %v101 = vld [vmem:[#allocation2 + $0x1f0] sm:$0xff]
    %v102 = vld [vmem:[#allocation2 + $0x1f8] sm:$0xff]
    %v103 = vadd.f32 %v39, %v47
    %v104 = vadd.f32 %v103, %v55
    %v105 = vadd.f32 %v104, %v63
    %v106 = vadd.f32 %v105, %v71
    %v107 = vadd.f32 %v106, %v79
    %v108 = vadd.f32 %v107, %v87
    %v109 = vadd.f32 %v108, %v95
    %v110 = vadd.f32 %v40, %v48
    %v111 = vadd.f32 %v110, %v56
    %v112 = vadd.f32 %v111, %v64
    %v113 = vadd.f32 %v112, %v72
    %v114 = vadd.f32 %v113, %v80
    %v115 = vadd.f32 %v114, %v88
    %v116 = vadd.f32 %v115, %v96
    %v117 = vadd.f32 %v41, %v49
    %v118 = vadd.f32 %v117, %v57
    %v119 = vadd.f32 %v118, %v65
    %v120 = vadd.f32 %v119, %v73
    %v121 = vadd.f32 %v120, %v81
    %v122 = vadd.f32 %v121, %v89
    %v123 = vadd.f32 %v122, %v97
    %v124 = vadd.f32 %v42, %v50
    %v125 = vadd.f32 %v124, %v58
    %v126 = vadd.f32 %v125, %v66
    %v127 = vadd.f32 %v126, %v74
    %v128 = vadd.f32 %v127, %v82
    %v129 = vadd.f32 %v128, %v90
    %v130 = vadd.f32 %v129, %v98
    %v131 = vadd.f32 %v43, %v51
    %v132 = vadd.f32 %v131, %v59
    %v133 = vadd.f32 %v132, %v67
    %v134 = vadd.f32 %v133, %v75
    %v135 = vadd.f32 %v134, %v83
    %v136 = vadd.f32 %v135, %v91
    %v137 = vadd.f32 %v136, %v99
    %v138 = vadd.f32 %v44, %v52
    %v139 = vadd.f32 %v138, %v60
    %v140 = vadd.f32 %v139, %v68
    %v141 = vadd.f32 %v140, %v76
    %v142 = vadd.f32 %v141, %v84
    %v143 = vadd.f32 %v142, %v92
    %v144 = vadd.f32 %v143, %v100
    %v145 = vadd.f32 %v45, %v53
    %v146 = vadd.f32 %v145, %v61
    %v147 = vadd.f32 %v146, %v69
    %v148 = vadd.f32 %v147, %v77
    %v149 = vadd.f32 %v148, %v85
    %v150 = vadd.f32 %v149, %v93
    %v151 = vadd.f32 %v150, %v101
    %v152 = vadd.f32 %v46, %v54
    %v153 = vadd.f32 %v152, %v62
    %v154 = vadd.f32 %v153, %v70
    %v155 = vadd.f32 %v154, %v78
    %v156 = vadd.f32 %v155, %v86
    %v157 = vadd.f32 %v156, %v94
    %v158 = vadd.f32 %v157, %v102
    %v159 = vmul.f32 %v39, %v39
    %v160 = vmul.f32 %v40, %v40
    %v161 = vmul.f32 %v41, %v41
    %v162 = vmul.f32 %v42, %v42
    %v163 = vmul.f32 %v43, %v43
    %v164 = vmul.f32 %v44, %v44
    %v165 = vmul.f32 %v45, %v45
    %v166 = vmul.f32 %v46, %v46
    %v167 = vmul.f32 %v47, %v47
    %v168 = vmul.f32 %v48, %v48
    %v169 = vmul.f32 %v49, %v49
    %v170 = vmul.f32 %v50, %v50
    %v171 = vmul.f32 %v51, %v51
    %v172 = vmul.f32 %v52, %v52
    %v173 = vmul.f32 %v53, %v53
    %v174 = vmul.f32 %v54, %v54
    %v175 = vmul.f32 %v55, %v55
    %v176 = vmul.f32 %v56, %v56
    %v177 = vmul.f32 %v57, %v57
    %v178 = vmul.f32 %v58, %v58
    %v179 = vmul.f32 %v59, %v59
    %v180 = vmul.f32 %v60, %v60
    %v181 = vmul.f32 %v61, %v61
    %v182 = vmul.f32 %v62, %v62
    %v183 = vmul.f32 %v63, %v63
    %v184 = vmul.f32 %v64, %v64
    %v185 = vmul.f32 %v65, %v65
    %v186 = vmul.f32 %v66, %v66
    %v187 = vmul.f32 %v67, %v67
    %v188 = vmul.f32 %v68, %v68
    %v189 = vmul.f32 %v69, %v69
    %v190 = vmul.f32 %v70, %v70
    %v191 = vmul.f32 %v71, %v71
    %v192 = vmul.f32 %v72, %v72
    %v193 = vmul.f32 %v73, %v73
    %v194 = vmul.f32 %v74, %v74
    %v195 = vmul.f32 %v75, %v75
    %v196 = vmul.f32 %v76, %v76
    %v197 = vmul.f32 %v77, %v77
    %v198 = vmul.f32 %v78, %v78
    %v199 = vmul.f32 %v79, %v79
    %v200 = vmul.f32 %v80, %v80
    %v201 = vmul.f32 %v81, %v81
    %v202 = vmul.f32 %v82, %v82
    %v203 = vmul.f32 %v83, %v83
    %v204 = vmul.f32 %v84, %v84
    %v205 = vmul.f32 %v85, %v85
    %v206 = vmul.f32 %v86, %v86
    %v207 = vmul.f32 %v87, %v87
    %v208 = vmul.f32 %v88, %v88
    %v209 = vmul.f32 %v89, %v89
    %v210 = vmul.f32 %v90, %v90
    %v211 = vmul.f32 %v91, %v91
    %v212 = vmul.f32 %v92, %v92
    %v213 = vmul.f32 %v93, %v93
    %v214 = vmul.f32 %v94, %v94
    %v215 = vmul.f32 %v95, %v95
    %v216 = vmul.f32 %v96, %v96
    %v217 = vmul.f32 %v97, %v97
    %v218 = vmul.f32 %v98, %v98
    %v219 = vmul.f32 %v99, %v99
    %v220 = vmul.f32 %v100, %v100
    %v221 = vmul.f32 %v101, %v101
    %v222 = vmul.f32 %v102, %v102
    %v223 = vadd.f32 %v159, %v167
    %v224 = vadd.f32 %v223, %v175
    %v225 = vadd.f32 %v224, %v183
    %v226 = vadd.f32 %v225, %v191
    %v227 = vadd.f32 %v226, %v199
    %v228 = vadd.f32 %v227, %v207
    %v229 = vadd.f32 %v228, %v215
    %v230 = vadd.f32 %v160, %v168
    %v231 = vadd.f32 %v230, %v176
    %v232 = vadd.f32 %v231, %v184
    %v233 = vadd.f32 %v232, %v192
    %v234 = vadd.f32 %v233, %v200
    %v235 = vadd.f32 %v234, %v208
    %v236 = vadd.f32 %v235, %v216
    %v237 = vadd.f32 %v161, %v169
    %v238 = vadd.f32 %v237, %v177
    %v239 = vadd.f32 %v238, %v185
    %v240 = vadd.f32 %v239, %v193
    %v241 = vadd.f32 %v240, %v201
    %v242 = vadd.f32 %v241, %v209
    %v243 = vadd.f32 %v242, %v217
    %v244 = vadd.f32 %v162, %v170
    %v245 = vadd.f32 %v244, %v178
    %v246 = vadd.f32 %v245, %v186
    %v247 = vadd.f32 %v246, %v194
    %v248 = vadd.f32 %v247, %v202
    %v249 = vadd.f32 %v248, %v210
    %v250 = vadd.f32 %v249, %v218
    %v251 = vadd.f32 %v163, %v171
    %v252 = vadd.f32 %v251, %v179
    %v253 = vadd.f32 %v252, %v187
    %v254 = vadd.f32 %v253, %v195
    %v255 = vadd.f32 %v254, %v203
    %v256 = vadd.f32 %v255, %v211
    %v257 = vadd.f32 %v256, %v219
    %v258 = vadd.f32 %v164, %v172
    %v259 = vadd.f32 %v258, %v180
    %v260 = vadd.f32 %v259, %v188
    %v261 = vadd.f32 %v260, %v196
    %v262 = vadd.f32 %v261, %v204
    %v263 = vadd.f32 %v262, %v212
    %v264 = vadd.f32 %v263, %v220
    %v265 = vadd.f32 %v165, %v173
    %v266 = vadd.f32 %v265, %v181
    %v267 = vadd.f32 %v266, %v189
    %v268 = vadd.f32 %v267, %v197
    %v269 = vadd.f32 %v268, %v205
    %v270 = vadd.f32 %v269, %v213
    %v271 = vadd.f32 %v270, %v221
    %v272 = vadd.f32 %v166, %v174
    %v273 = vadd.f32 %v272, %v182
    %v274 = vadd.f32 %v273, %v190
    %v275 = vadd.f32 %v274, %v198
    %v276 = vadd.f32 %v275, %v206
    %v277 = vadd.f32 %v276, %v214
    %v278 = vadd.f32 %v277, %v222
    %v279 = vld [vmem:[%s1] sm:$0xff]
    %v280 = vld [vmem:[%s1 + $0x8] sm:$0xff]
    %v281 = vld [vmem:[%s1 + $0x10] sm:$0xff]
    %v282 = vld [vmem:[%s1 + $0x18] sm:$0xff]
    %v283 = vadd.f32 %v109, %v116
    %284 = vadd.xlane.f32.xlu0 %v283
    %v285 = vpop.xlane.xlu0 %284
    %v286 = vadd.f32 %v123, %v130
    %287 = vadd.xlane.f32.xlu0 %v286
    %v288 = vpop.xlane.xlu0 %287
    %v289 = vadd.f32 %v137, %v144
    %290 = vadd.xlane.f32.xlu0 %v289
    %v291 = vpop.xlane.xlu0 %290
    %v292 = vadd.f32 %v151, %v158
    %293 = vadd.xlane.f32.xlu0 %v292
    %v294 = vpop.xlane.xlu0 %293
    %v295 = vadd.f32 %v279, %v285
    %v296 = vadd.f32 %v280, %v288
    %v297 = vadd.f32 %v281, %v291
    %v298 = vadd.f32 %v282, %v294
    %vm299 = vcmask 7168
    %300 = vst.msk [vmem:[%s1] sm:$0xff] %vm299, %v295
    %301 = vst.msk [vmem:[%s1 + $0x8] sm:$0xff] %vm299, %v296
    %302 = vst.msk [vmem:[%s1 + $0x10] sm:$0xff] %vm299, %v297
    %303 = vst.msk [vmem:[%s1 + $0x18] sm:$0xff] %vm299, %v298
    %v304 = vld [vmem:[%s2] sm:$0xff]
    %v305 = vld [vmem:[%s2 + $0x8] sm:$0xff]
    %v306 = vld [vmem:[%s2 + $0x10] sm:$0xff]
    %v307 = vld [vmem:[%s2 + $0x18] sm:$0xff]
    %v308 = vadd.f32 %v229, %v236
    %309 = vadd.xlane.f32.xlu0 %v308
    %v310 = vpop.xlane.xlu0 %309
    %v311 = vadd.f32 %v243, %v250
    %312 = vadd.xlane.f32.xlu0 %v311
    %v313 = vpop.xlane.xlu0 %312
    %v314 = vadd.f32 %v257, %v264
    %315 = vadd.xlane.f32.xlu0 %v314
    %v316 = vpop.xlane.xlu0 %315
    %v317 = vadd.f32 %v271, %v278
    %318 = vadd.xlane.f32.xlu0 %v317
    %v319 = vpop.xlane.xlu0 %318
    %v320 = vadd.f32 %v304, %v310
    %v321 = vadd.f32 %v305, %v313
    %v322 = vadd.f32 %v306, %v316
    %v323 = vadd.f32 %v307, %v319
    %324 = vst.msk [vmem:[%s2] sm:$0xff] %vm299, %v320
    %325 = vst.msk [vmem:[%s2 + $0x8] sm:$0xff] %vm299, %v321
    %326 = vst.msk [vmem:[%s2 + $0x10] sm:$0xff] %vm299, %v322
    %327 = vst.msk [vmem:[%s2 + $0x18] sm:$0xff] %vm299, %v323
    // Predicated region
    $region14: #{tpu_custom_call.1} parent=1 // pred_check
      _
    $region15: #{tpu_custom_call.1} parent=1 // pred_check_branch
      %329 = sbr.rel (0) target = $region17
    $region16: #{tpu_custom_call.1} parent=1 // pred_region
      _
    $region17: #{tpu_custom_call.1} parent=1 // pred_fallthru
      _
    // Predicated region
    $region18: #{tpu_custom_call.1} parent=1 // pred_check
      _
    $region19: #{tpu_custom_call.1} parent=1 // pred_check_branch
      %331 = sbr.rel (0) target = $region21
    $region20: #{tpu_custom_call.1} parent=1 // pred_region
      _
    $region21: #{tpu_custom_call.1} parent=1 // pred_fallthru
      _
    // Predicated region
    $region22: #{tpu_custom_call.1} parent=1 // pred_check
      _
    $region23: #{tpu_custom_call.1} parent=1 // pred_check_branch
      %333 = sbr.rel (0) target = $region25
    $region24: #{tpu_custom_call.1} parent=1 // pred_region
      _
    $region25: #{tpu_custom_call.1} parent=1 // pred_fallthru
      _
    // Predicated region
    $region26: #{tpu_custom_call.1} parent=1 // pred_check
      _
    $region27: #{tpu_custom_call.1} parent=1 // pred_check_branch
      %335 = sbr.rel (0) target = $region29
    $region28: #{tpu_custom_call.1} parent=1 // pred_region
      _
    $region29: #{tpu_custom_call.1} parent=1 // pred_fallthru
      _
    %336 = vsyncpa [#allocation3], 1

</llo_original>
